<compile_context>
chip_gen: v6e
topology: v6e:2x2x1
jax: 0.10.0
libtpu: 0.0.40
codegen_flags: <defaults>
</compile_context>

<pallas_src>
import functools
import math

import jax
import jax.numpy as jnp
from jax import lax
from jax.experimental import pallas as pl
from jax.experimental.pallas import tpu as pltpu

_EPS = 1e-10
_INV_SQRT_2PI = 0.3989422804014327
_INV_SQRT_2 = 0.7071067811865476
_TARGET_BLOCK_BYTES = 2 * 1024 * 1024     # per f32 output block buffer


def _rv_relu_kernel(x_ref, o_ref, *, f):
    # x_ref: (block_n, 2F) input dtype; o_ref: (block_n, 2F) f32.
    means = x_ref[:, :f].astype(jnp.float32)
    varis = x_ref[:, f:].astype(jnp.float32)

    veps = varis + _EPS
    inv_r = lax.rsqrt(veps)               # EUP
    r_varis = veps * inv_r                # sqrt(varis + eps) without sqrt/div
    g = means * inv_r                     # mu / sigma  (= -a)

    # Shared exponential: exp(-g^2/2) is both the N(0,1) pdf kernel and
    # exp(-z^2) for z = |g|/sqrt(2) used by the erf tail.
    e = jnp.exp(-0.5 * (g * g))           # EUP
    rphi = r_varis * (_INV_SQRT_2PI * e)  # sigma * phi(a)

    # Phi(-|g|) = 0.5*erfc(|g|/sqrt(2)) via Abramowitz & Stegun 7.1.26.
    az = jnp.minimum(jnp.abs(g) * _INV_SQRT_2, 12.0)   # clamp: e == 0 out there
    d = 1.0 + 0.3275911 * az
    t0 = pl.reciprocal(d, approx=True)    # EUP
    t = t0 * (2.0 - d * t0)               # one Newton step -> ~1e-7 rel. acc.
    poly = t * (0.254829592
                + t * (-0.284496736
                       + t * (1.421413741
                              + t * (-1.453152027
                                     + t * 1.061405429))))
    h = 0.5 * (poly * e)                  # Phi(-|g|)

    # Phi(a), a = -mu/sigma: h when mu >= 0, 1 - h when mu < 0.
    cdf_a = jnp.where(means >= 0.0, h, 1.0 - h)
    q = 1.0 - cdf_a                       # 1 - Phi(a)

    # E[relu] = mu - dm with dm = mu*Phi(a) - sigma*phi(a);
    # Var[relu] = E[y^2] - E[y]^2 = q*(mu*dm + sigma^2) + rphi*dm.
    dm = means * cdf_a - rphi
    est_means = means - dm
    est_varis_raw = q * (means * dm + veps) + rphi * dm
    est_varis = jnp.where(est_varis_raw <= 0.0, _EPS, est_varis_raw)

    o_ref[:, :f] = est_means
    o_ref[:, f:] = est_varis


def _cdiv(a, b):
    return -(-a // b)


def _choose_block_n(n, row_bytes):
    """Rows per block: multiple of 8 (or all of N), ~2 MiB of output per block,
    preferring an exact divisor of N and an even grid-step count (v7x)."""
    if n <= 8:
        return n
    cap = min(n, max(8, _TARGET_BLOCK_BYTES // max(row_bytes, 1)))
    cap = max(8, (cap // 8) * 8)
    lo = max(8, cap - 8 * 64)             # bounded, trace-time-only search
    for blk in range(cap, lo - 1, -8):
        if n % blk == 0 and (n // blk) % 2 == 0:
            return blk
    for blk in range(cap, lo - 1, -8):
        if n % blk == 0:
            return blk
    return cap


@jax.jit
def random_variable_relu(x):
    """(N, 2, *spatial) -> (N, 2, *spatial) float32 moment-propagating ReLU."""
    assert x.ndim >= 2 and x.shape[1] == 2, "dim 1 must hold (mean, variance)"
    n = x.shape[0]
    spatial = x.shape[2:]
    f = math.prod(spatial) if spatial else 1
    w = 2 * f

    if x.dtype not in (jnp.float32, jnp.bfloat16, jnp.float16):
        x = x.astype(jnp.float32)
    # Free view (pure dim merge, no data movement): channel-0 plane occupies
    # columns [0, F), channel-1 plane columns [F, 2F) of each row.
    x2 = x.reshape(n, w)

    block_n = _choose_block_n(n, w * 4)
    grid_n = _cdiv(n, block_n)

    in_row_bytes = w * x2.dtype.itemsize
    out_row_bytes = w * 4
    vmem_limit = int(min(max(24 * 2**20,
                             2 * block_n * (in_row_bytes + out_row_bytes)
                             + 8 * 2**20),
                         128 * 2**20))

    out = pl.pallas_call(
        functools.partial(_rv_relu_kernel, f=f),
        out_shape=jax.ShapeDtypeStruct((n, w), jnp.float32),
        grid_spec=pltpu.PrefetchScalarGridSpec(
            num_scalar_prefetch=0,
            grid=(grid_n,),
            in_specs=[pl.BlockSpec((block_n, w), lambda i: (i, 0))],
            out_specs=pl.BlockSpec((block_n, w), lambda i: (i, 0)),
        ),
        compiler_params=pltpu.CompilerParams(
            dimension_semantics=("parallel",),
            vmem_limit_bytes=vmem_limit,
        ),
    )(x2)

    # Free view back to the module's (N, 2, *spatial) layout.
    return out.reshape((n, 2) + spatial)


def _reference(x):
    # Pure-JAX reference mirroring the PyTorch forward (float32).
    x = x.astype(jnp.float32)
    means = x[:, 0, ...]
    varis = x[:, 1, ...]
    r_varis = jnp.sqrt(varis + _EPS)
    a = -means / r_varis
    phi_a = jnp.exp(jax.scipy.stats.norm.logpdf(a))
    cdf_a = jax.scipy.stats.norm.cdf(a)
    est_means = (1.0 - cdf_a) * means + r_varis * phi_a
    est_varis_raw = ((1.0 - cdf_a) * (varis + means ** 2 * cdf_a)
                     + r_varis * phi_a * (2.0 * means * cdf_a
                                          - means - r_varis * phi_a))
    est_varis = jnp.where(est_varis_raw <= 0.0, _EPS, est_varis_raw)
    return jnp.concatenate((est_means[:, None], est_varis[:, None]), axis=1)


if __name__ == "__main__":
    key = jax.random.PRNGKey(0)
    k_m, k_v = jax.random.split(key)
    N, H, W = 2, 16, 16
    means = jax.random.normal(k_m, (N, 1, H, W), dtype=jnp.float32)
    varis = jax.random.uniform(k_v, (N, 1, H, W), dtype=jnp.float32,
                               minval=0.01, maxval=1.0)
    x = jnp.concatenate((means, varis), axis=1)          # (N, 2, H, W)

    out = jax.block_until_ready(random_variable_relu(x))
    ref = jax.block_until_ready(_reference(x))

    assert out.shape == x.shape and out.dtype == jnp.float32
    assert jnp.allclose(out, ref, rtol=1e-4, atol=1e-5), "mismatch vs reference"
    print("KERNEL_OK")
</pallas_src>

<mosaic_0001>
module attributes {stable_mosaic.version = 11 : i64} {
  func.func @_rv_relu_kernel(%arg0: i32, %arg1: memref<2x512xf32, #tpu.memory_space<vmem>>, %arg2: memref<2x512xf32, #tpu.memory_space<vmem>>) attributes {dimension_semantics = [#tpu.dimension_semantics<parallel>], iteration_bounds = array<i64: 1>, scalar_prefetch = 0 : i64, scratch_operands = 0 : i64, tpu.core_type = #tpu.core_type<tc>, window_params = [{transform_indices = @transform_0, window_bounds = array<i64: 2, 512>}, {transform_indices = @transform_1, window_bounds = array<i64: 2, 512>}]} {
    %c0 = arith.constant 0 : index
    %c0_0 = arith.constant 0 : index
    %0 = vector.load %arg1[%c0, %c0_0] : memref<2x512xf32, #tpu.memory_space<vmem>>, vector<2x256xf32>
    %c0_1 = arith.constant 0 : index
    %c256 = arith.constant 256 : index
    %1 = vector.load %arg1[%c0_1, %c256] : memref<2x512xf32, #tpu.memory_space<vmem>>, vector<2x256xf32>
    %cst = arith.constant 1.000000e-10 : f32
    %2 = vector.broadcast %cst : f32 to vector<2x256xf32>
    %3 = arith.addf %1, %2 : vector<2x256xf32>
    %4 = math.rsqrt %3 : vector<2x256xf32>
    %5 = arith.mulf %3, %4 : vector<2x256xf32>
    %6 = arith.mulf %0, %4 : vector<2x256xf32>
    %7 = arith.mulf %6, %6 : vector<2x256xf32>
    %cst_2 = arith.constant -5.000000e-01 : f32
    %8 = vector.broadcast %cst_2 : f32 to vector<2x256xf32>
    %9 = arith.mulf %8, %7 : vector<2x256xf32>
    %10 = math.exp %9 : vector<2x256xf32>
    %cst_3 = arith.constant 0.398942292 : f32
    %11 = vector.broadcast %cst_3 : f32 to vector<2x256xf32>
    %12 = arith.mulf %11, %10 : vector<2x256xf32>
    %13 = arith.mulf %5, %12 : vector<2x256xf32>
    %14 = math.absf %6 : vector<2x256xf32>
    %cst_4 = arith.constant 0.707106769 : f32
    %15 = vector.broadcast %cst_4 : f32 to vector<2x256xf32>
    %16 = arith.mulf %14, %15 : vector<2x256xf32>
    %cst_5 = arith.constant 1.200000e+01 : f32
    %17 = vector.broadcast %cst_5 : f32 to vector<2x256xf32>
    %18 = arith.minimumf %16, %17 : vector<2x256xf32>
    %cst_6 = arith.constant 0.327591091 : f32
    %19 = vector.broadcast %cst_6 : f32 to vector<2x256xf32>
    %20 = arith.mulf %19, %18 : vector<2x256xf32>
    %cst_7 = arith.constant 1.000000e+00 : f32
    %21 = vector.broadcast %cst_7 : f32 to vector<2x256xf32>
    %22 = arith.addf %21, %20 : vector<2x256xf32>
    %23 = tpu.reciprocal %22 {approx = true} : vector<2x256xf32> -> vector<2x256xf32>
    %24 = arith.mulf %22, %23 : vector<2x256xf32>
    %cst_8 = arith.constant 2.000000e+00 : f32
    %25 = vector.broadcast %cst_8 : f32 to vector<2x256xf32>
    %26 = arith.subf %25, %24 : vector<2x256xf32>
    %27 = arith.mulf %23, %26 : vector<2x256xf32>
    %cst_9 = arith.constant 1.06140542 : f32
    %28 = vector.broadcast %cst_9 : f32 to vector<2x256xf32>
    %29 = arith.mulf %27, %28 : vector<2x256xf32>
    %cst_10 = arith.constant -1.45315206 : f32
    %30 = vector.broadcast %cst_10 : f32 to vector<2x256xf32>
    %31 = arith.addf %30, %29 : vector<2x256xf32>
    %32 = arith.mulf %27, %31 : vector<2x256xf32>
    %cst_11 = arith.constant 1.42141378 : f32
    %33 = vector.broadcast %cst_11 : f32 to vector<2x256xf32>
    %34 = arith.addf %33, %32 : vector<2x256xf32>
    %35 = arith.mulf %27, %34 : vector<2x256xf32>
    %cst_12 = arith.constant -0.284496725 : f32
    %36 = vector.broadcast %cst_12 : f32 to vector<2x256xf32>
    %37 = arith.addf %36, %35 : vector<2x256xf32>
    %38 = arith.mulf %27, %37 : vector<2x256xf32>
    %cst_13 = arith.constant 0.254829586 : f32
    %39 = vector.broadcast %cst_13 : f32 to vector<2x256xf32>
    %40 = arith.addf %39, %38 : vector<2x256xf32>
    %41 = arith.mulf %27, %40 : vector<2x256xf32>
    %42 = arith.mulf %41, %10 : vector<2x256xf32>
    %cst_14 = arith.constant 5.000000e-01 : f32
    %43 = vector.broadcast %cst_14 : f32 to vector<2x256xf32>
    %44 = arith.mulf %43, %42 : vector<2x256xf32>
    %cst_15 = arith.constant 0.000000e+00 : f32
    %45 = vector.broadcast %cst_15 : f32 to vector<2x256xf32>
    %46 = arith.cmpf oge, %0, %45 : vector<2x256xf32>
    %cst_16 = arith.constant 1.000000e+00 : f32
    %47 = vector.broadcast %cst_16 : f32 to vector<2x256xf32>
    %48 = arith.subf %47, %44 : vector<2x256xf32>
    %49 = arith.select %46, %44, %48 : vector<2x256xi1>, vector<2x256xf32>
    %cst_17 = arith.constant 1.000000e+00 : f32
    %50 = vector.broadcast %cst_17 : f32 to vector<2x256xf32>
    %51 = arith.subf %50, %49 : vector<2x256xf32>
    %52 = arith.mulf %0, %49 : vector<2x256xf32>
    %53 = arith.subf %52, %13 : vector<2x256xf32>
    %54 = arith.subf %0, %53 : vector<2x256xf32>
    %55 = arith.mulf %0, %53 : vector<2x256xf32>
    %56 = arith.addf %55, %3 : vector<2x256xf32>
    %57 = arith.mulf %51, %56 : vector<2x256xf32>
    %58 = arith.mulf %13, %53 : vector<2x256xf32>
    %59 = arith.addf %57, %58 : vector<2x256xf32>
    %cst_18 = arith.constant 0.000000e+00 : f32
    %60 = vector.broadcast %cst_18 : f32 to vector<2x256xf32>
    %61 = arith.cmpf ole, %59, %60 : vector<2x256xf32>
    %cst_19 = arith.constant 1.000000e-10 : f32
    %62 = vector.broadcast %cst_19 : f32 to vector<2x256xf32>
    %63 = arith.select %61, %62, %59 : vector<2x256xi1>, vector<2x256xf32>
    %c0_20 = arith.constant 0 : index
    %c0_21 = arith.constant 0 : index
    %64 = vector.load %arg2[%c0_20, %c0_21] : memref<2x512xf32, #tpu.memory_space<vmem>>, vector<2x256xf32>
    tpu.vector_store %arg2[%c0_20, %c0_21], %54 {strides = array<i32>} : memref<2x512xf32, #tpu.memory_space<vmem>>, vector<2x256xf32>,
    %c0_22 = arith.constant 0 : index
    %c256_23 = arith.constant 256 : index
    %65 = vector.load %arg2[%c0_22, %c256_23] : memref<2x512xf32, #tpu.memory_space<vmem>>, vector<2x256xf32>
    tpu.vector_store %arg2[%c0_22, %c256_23], %63 {strides = array<i32>} : memref<2x512xf32, #tpu.memory_space<vmem>>, vector<2x256xf32>,
    return
  }
  func.func @transform_0(%arg0: i32) -> (i32, i32) {
    %c0_i32 = arith.constant 0 : i32
    %c0_i32_0 = arith.constant 0 : i32
    return %arg0, %c0_i32 : i32, i32
  }
  func.func @transform_1(%arg0: i32) -> (i32, i32) {
    %c0_i32 = arith.constant 0 : i32
    %c0_i32_0 = arith.constant 0 : i32
    return %arg0, %c0_i32 : i32, i32
  }
}

</mosaic_0001>

<llo_original>
// kernel: random_variable_relu.1
$region0: #{random_variable_relu.1}
  #allocation0 [shape = 'u32[]', space=smem, size = 0x4, offset = 0x4, fixed_abs, tag = 'smem constant byte address 0x4 - core index']
  #allocation1 [shape = 'u32[144,128]{1,0:T(1,128)}', space=vmem, size = 0x12000, scoped, tag = 'internal scratch']
  %s0 = inlined_call_operand.vmem [shape: f32[2,512], index: 0, kind: input, shape index: {}]
  %s1 = inlined_call_operand.vmem [shape: f32[2,512], index: 1, kind: output, shape index: {}]
  %s2 = sld [smem:[#allocation0]]
  $region14: #{random_variable_relu.1} parent=0
    _
  %s4 = ssub.s32 1, %s2
  %s5 = scalar_select 0, %s4, %s2
  // Predicated region
  $region2: #{random_variable_relu.1} parent=0 // pred_check
    _
  $region3: #{random_variable_relu.1} parent=0 // pred_check_branch
    %7 = sbr.rel (0) target = $region5
  $region4: #{random_variable_relu.1} parent=0 // pred_region
    _
  $region5: #{random_variable_relu.1} parent=0 // pred_fallthru
    _
  %v8 = vld [vmem:[%s0] sm:$0xf]
  %v9 = vld [vmem:[%s0 + $0x4] sm:$0xf]
  %v10 = vadd.f32 %v9, 1e-10
  %v11 = vrsqrt.pop %v10
  %v12 = vmul.f32 %v10, %v11
  %v13 = vmul.f32 %v8, %v11
  %v14 = vmul.f32 %v13, %v13
  %v15 = vmul.f32 %v14, -0.5
  %v16 = vmul.f32 %v15, 1.442695
  %v17 = vpow.pop %v16
  %v18 = vmul.f32 %v17, 0.3989423
  %v19 = vmul.f32 %v12, %v18
  %v20 = vand.u32 2147483647, %v13
  %v21 = vmul.f32 %v20, 0.70710677
  %v22 = vmin.f32 %v21, 12.0
  %v23 = vmul.f32 %v22, 0.3275911
  %v24 = vadd.f32 %v23, 1.0
  %v25 = vrcp.pop %v24
  %v26 = vmul.f32 %v24, %v25
  %v27 = vsub.f32 2.0, %v26
  %v28 = vmul.f32 %v25, %v27
  %v29 = vmul.f32 %v28, 1.0614054
  %v30 = vadd.f32 %v29, -1.4531521
  %v31 = vmul.f32 %v28, %v30
  %v32 = vadd.f32 %v31, 1.4214138
  %v33 = vmul.f32 %v28, %v32
  %v34 = vadd.f32 %v33, -0.28449672
  %v35 = vmul.f32 %v28, %v34
  %v36 = vadd.f32 %v35, 0.2548296
  %v37 = vmul.f32 %v28, %v36
  %v38 = vmul.f32 %v37, %v17
  %v39 = vmul.f32 %v38, 0.5
  %vm40 = vcmp.ge.f32.partialorder %v8, 0.0
  %v41 = vsub.f32 1.0, %v39
  %v42 = vsel %vm40, %v39, %v41
  %v43 = vsub.f32 1.0, %v42
  %v44 = vmul.f32 %v8, %v42
  %v45 = vsub.f32 %v44, %v19
  %v46 = vsub.f32 %v8, %v45
  %v47 = vmul.f32 %v8, %v45
  %v48 = vadd.f32 %v47, %v10
  %v49 = vmul.f32 %v43, %v48
  %v50 = vmul.f32 %v19, %v45
  %v51 = vadd.f32 %v49, %v50
  %vm52 = vcmp.le.f32.partialorder %v51, 0.0
  %v53 = vsel %vm52, 1e-10, %v51
  %54 = vst [vmem:[%s1] sm:$0xf] %v46
  %55 = vst [vmem:[%s1 + $0x4] sm:$0xf] %v53
  // Predicated region
  $region6: #{random_variable_relu.1} parent=0 // pred_check
    _
  $region7: #{random_variable_relu.1} parent=0 // pred_check_branch
    %57 = sbr.rel (0) target = $region9
  $region8: #{random_variable_relu.1} parent=0 // pred_region
    _
  $region9: #{random_variable_relu.1} parent=0 // pred_fallthru
    _
  // Predicated region
  $region10: #{random_variable_relu.1} parent=0 // pred_check
    _
  $region11: #{random_variable_relu.1} parent=0 // pred_check_branch
    %59 = sbr.rel (0) target = $region13
  $region12: #{random_variable_relu.1} parent=0 // pred_region
    _
  $region13: #{random_variable_relu.1} parent=0 // pred_fallthru
    _

</llo_original>
